<compile_context>
chip_gen: v7x
topology: tpu7x:2x2x1
jax: 0.10.0
libtpu: 0.0.40
codegen_flags: <defaults>
</compile_context>

<pallas_src>
import itertools

import numpy as np
import jax
import jax.numpy as jnp
from jax.experimental import pallas as pl
from jax.experimental.pallas import tpu as pltpu

NUM_GENERATED_TRIPLES = 10
MATCHER = "avg"


def _round_up(x, m):
    return ((x + m - 1) // m) * m


def _cdiv(a, b):
    return -(-a // b)


def _device_kind():
    try:
        return jax.devices()[0].device_kind.lower()
    except Exception:  # pragma: no cover - defensive
        return ""


def _default_tile_n():
    # 128-row M tiles fill the v5e MXU (4x128^2); 256 matches v6e/v7x (2x256^2).
    return 128 if "v5" in _device_kind() else 256


def _has_megacore():
    kind = _device_kind()
    return ("v7" in kind) or ("7x" in kind)


def _vmem_ceiling_bytes():
    # ~80% of physical VMEM, never the full part: ≈51 MiB on 64-MiB v7x,
    # ≈102 MiB on 128-MiB v5e/v6e.  Conservative 64-MiB default if query fails.
    try:
        cap = int(pltpu.get_tpu_info().vmem_capacity_bytes)
    except Exception:  # pragma: no cover - defensive
        cap = 64 << 20
    return max(min(int(cap * 0.8), cap - (8 << 20)), 16 << 20)


# ---------------------------------------------------------------------------
# Pallas kernel: fused cost-matrix tile
# ---------------------------------------------------------------------------
def _cost_kernel(rel_ref, hs_ref, he_ref, ts_ref, te_ref,
                 wr_ref, whs_ref, whe_ref, wts_ref, wte_ref, cost_ref):
    def probs_bf16(ref):
        x = ref[...].astype(jnp.float32)
        x = x - jnp.max(x, axis=-1, keepdims=True)
        e = jnp.exp(x)
        inv = pl.reciprocal(jnp.sum(e, axis=-1, keepdims=True), approx=True)
        return (e * inv).astype(jnp.bfloat16)

    # Five accumulating segment matmuls == one block-diagonal gather matmul
    # (identical FLOPs), f32 accumulation on the MXU.
    acc = jnp.dot(probs_bf16(rel_ref), wr_ref[...],
                  preferred_element_type=jnp.float32)
    acc = acc + jnp.dot(probs_bf16(hs_ref), whs_ref[...],
                        preferred_element_type=jnp.float32)
    acc = acc + jnp.dot(probs_bf16(he_ref), whe_ref[...],
                        preferred_element_type=jnp.float32)
    acc = acc + jnp.dot(probs_bf16(ts_ref), wts_ref[...],
                        preferred_element_type=jnp.float32)
    acc = acc + jnp.dot(probs_bf16(te_ref), wte_ref[...],
                        preferred_element_type=jnp.float32)
    cost_ref[...] = acc


def _scaled_one_hot(idx, depth, g_pad, weight):
    # [depth, g_pad] bf16; column j has `weight` at row idx[j], zeros elsewhere
    # (and all-zero padded columns).
    g = int(idx.shape[0])
    w = jax.nn.one_hot(idx.astype(jnp.int32), depth, dtype=jnp.float32).T
    w = w * jnp.float32(weight)
    w = jnp.pad(w, ((0, 0), (0, g_pad - g)))
    return w.astype(jnp.bfloat16)


def compute_cost_matrix(outputs, gold, loss_weight, tile_n=None):
    """Returns cost matrix [bsz*num_gen, num_gold_total] (float32)."""
    bsz, num_gen, num_classes = outputs["pred_rel_logits"].shape
    seq_len = outputs["head_start_logits"].shape[-1]
    n = bsz * num_gen
    g = int(gold["relation"].shape[0])
    g_pad = _round_up(max(g, 1), 128)        # lane-dense output last dim

    # Balanced N tiling; force >=2 tiles on megacore parts so both TCs work.
    if tile_n is None:
        default = _default_tile_n()
        num_tiles = max(1, _cdiv(n, default))
        if num_tiles == 1 and n >= 16 and _has_megacore():
            num_tiles = 2
        tile_n = _round_up(_cdiv(n, num_tiles), 8)
    else:
        tile_n = _round_up(max(1, min(tile_n, n)), 8)
    num_tiles = _cdiv(n, tile_n)

    # Unpadded logits, straight from the model (no host -inf padding copies).
    rel = outputs["pred_rel_logits"].reshape(n, num_classes)
    hs = outputs["head_start_logits"].reshape(n, seq_len)
    he = outputs["head_end_logits"].reshape(n, seq_len)
    ts = outputs["tail_start_logits"].reshape(n, seq_len)
    te = outputs["tail_end_logits"].reshape(n, seq_len)

    cr = float(loss_weight["relation"])
    ch = float(loss_weight["head_entity"])
    ct = float(loss_weight["tail_entity"])

    # Block-diagonal gather matrix, hoisted to host, pre-scaled, bf16, resident.
    w_rel = _scaled_one_hot(gold["relation"], num_classes, g_pad, -cr)
    w_hs = _scaled_one_hot(gold["head_start_index"], seq_len, g_pad, -0.5 * ch)
    w_he = _scaled_one_hot(gold["head_end_index"], seq_len, g_pad, -0.5 * ch)
    w_ts = _scaled_one_hot(gold["tail_start_index"], seq_len, g_pad, -0.5 * ct)
    w_te = _scaled_one_hot(gold["tail_end_index"], seq_len, g_pad, -0.5 * ct)

    # VMEM budget: double-buffered logit + output tiles, resident bf16 weights.
    in_item = jnp.dtype(rel.dtype).itemsize
    c_lane = _round_up(num_classes, 128)
    s_lane = _round_up(seq_len, 128)
    in_tile = tile_n * (c_lane + 4 * s_lane) * in_item
    w_bytes = (_round_up(num_classes, 8) + 4 * _round_up(seq_len, 8)) * g_pad * 2
    out_tile = tile_n * g_pad * 4
    needed = int(2 * (in_tile + out_tile) + 2 * w_bytes + (4 << 20))
    vmem_limit = int(min(max(needed, 16 << 20), _vmem_ceiling_bytes()))

    k_total = num_classes + 4 * seq_len
    cost_est = pl.CostEstimate(
        flops=int(2 * n * k_total * g_pad + 10 * n * k_total),
        transcendentals=int(n * k_total),
        bytes_accessed=int(in_item * n * k_total + 2 * k_total * g_pad
                           + 4 * n * g_pad),
    )

    cost_pad = pl.pallas_call(
        _cost_kernel,
        out_shape=jax.ShapeDtypeStruct((n, g_pad), jnp.float32),
        grid=(num_tiles,),
        in_specs=[
            pl.BlockSpec((tile_n, num_classes), lambda i: (i, 0)),  # rel logits
            pl.BlockSpec((tile_n, seq_len), lambda i: (i, 0)),      # head-start
            pl.BlockSpec((tile_n, seq_len), lambda i: (i, 0)),      # head-end
            pl.BlockSpec((tile_n, seq_len), lambda i: (i, 0)),      # tail-start
            pl.BlockSpec((tile_n, seq_len), lambda i: (i, 0)),      # tail-end
            pl.BlockSpec((num_classes, g_pad), lambda i: (0, 0)),   # w_rel (resident)
            pl.BlockSpec((seq_len, g_pad), lambda i: (0, 0)),       # w_hs
            pl.BlockSpec((seq_len, g_pad), lambda i: (0, 0)),       # w_he
            pl.BlockSpec((seq_len, g_pad), lambda i: (0, 0)),       # w_ts
            pl.BlockSpec((seq_len, g_pad), lambda i: (0, 0)),       # w_te
        ],
        out_specs=pl.BlockSpec((tile_n, g_pad), lambda i: (i, 0)),
        compiler_params=pltpu.CompilerParams(
            dimension_semantics=("parallel",),
            vmem_limit_bytes=vmem_limit,
        ),
        cost_estimate=cost_est,
    )(rel, hs, he, ts, te, w_rel, w_hs, w_he, w_ts, w_te)

    return cost_pad[:, :g]


# ---------------------------------------------------------------------------
# Host-side linear sum assignment (Jonker-Volgenant shortest augmenting path,
# equivalent to scipy.optimize.linear_sum_assignment).
# ---------------------------------------------------------------------------
def _linear_sum_assignment_np(cost):
    cost = np.asarray(cost, dtype=np.float64)
    if cost.ndim != 2:
        raise ValueError("cost must be 2-D")
    transpose = cost.shape[1] < cost.shape[0]
    if transpose:
        cost = cost.T
    nr, nc = cost.shape                       # nr <= nc
    u = np.zeros(nr)
    v = np.zeros(nc)
    path = np.full(nc, -1, dtype=np.int64)
    col4row = np.full(nr, -1, dtype=np.int64)
    row4col = np.full(nc, -1, dtype=np.int64)

    for cur_row in range(nr):
        shortest = np.full(nc, np.inf)
        SR = np.zeros(nr, dtype=bool)
        SC = np.zeros(nc, dtype=bool)
        remaining = list(range(nc - 1, -1, -1))
        min_val = 0.0
        i = cur_row
        sink = -1
        while sink == -1:
            SR[i] = True
            lowest = np.inf
            index = -1
            for it, j in enumerate(remaining):
                r = min_val + cost[i, j] - u[i] - v[j]
                if r < shortest[j]:
                    path[j] = i
                    shortest[j] = r
                if shortest[j] < lowest or (shortest[j] == lowest
                                            and row4col[j] == -1):
                    lowest = shortest[j]
                    index = it
            min_val = lowest
            if not np.isfinite(min_val):
                raise ValueError("infeasible cost matrix")
            j = remaining[index]
            if row4col[j] == -1:
                sink = j
            else:
                i = row4col[j]
            SC[j] = True
            remaining[index] = remaining[-1]
            remaining.pop()
        # dual update
        u[cur_row] += min_val
        for ii in range(nr):
            if SR[ii] and ii != cur_row:
                u[ii] += min_val - shortest[col4row[ii]]
        for jj in range(nc):
            if SC[jj]:
                v[jj] -= min_val - shortest[jj]
        # augment along the alternating path
        j = sink
        while True:
            ii = path[j]
            row4col[j] = ii
            col4row[ii], j = j, col4row[ii]
            if ii == cur_row:
                break

    if transpose:
        order = np.argsort(col4row)
        row_ind = col4row[order]
        col_ind = order.astype(np.int64)
    else:
        row_ind = np.arange(nr, dtype=np.int64)
        col_ind = col4row
    return row_ind.astype(np.int64), np.asarray(col_ind, dtype=np.int64)


# ---------------------------------------------------------------------------
# Full HungarianMatcher.forward
# ---------------------------------------------------------------------------
def hungarian_matcher_forward(outputs, targets, loss_weight, matcher="avg"):
    if matcher != "avg":
        # TODO(synk): 'min' matcher variant not implemented (module is configured with 'avg').
        raise ValueError("Wrong matcher")

    bsz, num_gen = outputs["pred_rel_logits"].shape[:2]
    gold = {
        "relation": jnp.concatenate([t["relation"] for t in targets]),
        "head_start_index": jnp.concatenate([t["head_start_index"] for t in targets]),
        "head_end_index": jnp.concatenate([t["head_end_index"] for t in targets]),
        "tail_start_index": jnp.concatenate([t["tail_start_index"] for t in targets]),
        "tail_end_index": jnp.concatenate([t["tail_end_index"] for t in targets]),
    }

    cost = compute_cost_matrix(outputs, gold, loss_weight)

    # Single device->host copy of the whole cost matrix (the assignment itself
    # is a sequential combinatorial algorithm, solved on host like the reference).
    cost_np = np.asarray(cost).reshape(bsz, num_gen, -1)
    num_gold = [int(t["relation"].shape[0]) for t in targets]
    splits = np.cumsum(num_gold)[:-1]
    chunks = np.split(cost_np, splits, axis=-1)
    indices = [_linear_sum_assignment_np(c[i]) for i, c in enumerate(chunks)]
    return [(np.asarray(i, dtype=np.int64), np.asarray(j, dtype=np.int64))
            for i, j in indices], cost


# ---------------------------------------------------------------------------
# Pure-JAX reference for the cost matrix (correctness check)
# ---------------------------------------------------------------------------
def _reference_cost(outputs, targets, loss_weight):
    cr, ch, ct = (loss_weight["relation"], loss_weight["head_entity"],
                  loss_weight["tail_entity"])
    cat = lambda k: jnp.concatenate([t[k] for t in targets])
    sm = lambda x: jax.nn.softmax(x.reshape(-1, x.shape[-1]).astype(jnp.float32), -1)
    pr, phs, phe = (sm(outputs["pred_rel_logits"]), sm(outputs["head_start_logits"]),
                    sm(outputs["head_end_logits"]))
    pts, pte = sm(outputs["tail_start_logits"]), sm(outputs["tail_end_logits"])
    return (-cr * pr[:, cat("relation")]
            - ch * 0.5 * (phs[:, cat("head_start_index")] + phe[:, cat("head_end_index")])
            - ct * 0.5 * (pts[:, cat("tail_start_index")] + pte[:, cat("tail_end_index")]))


def _brute_force_optimal_cost(block):
    r, c = block.shape
    best = np.inf
    for rows in itertools.permutations(range(r), c):
        best = min(best, block[list(rows), list(range(c))].sum())
    return best


if __name__ == "__main__":
    key = jax.random.PRNGKey(0)
    bsz, num_gen, num_classes, seq_len = 2, NUM_GENERATED_TRIPLES, 8, 32
    ks = jax.random.split(key, 5)

    outputs = {
        "pred_rel_logits": jax.random.normal(ks[0], (bsz, num_gen, num_classes), jnp.float32),
        "head_start_logits": jax.random.normal(ks[1], (bsz, num_gen, seq_len), jnp.float32),
        "head_end_logits": jax.random.normal(ks[2], (bsz, num_gen, seq_len), jnp.float32),
        "tail_start_logits": jax.random.normal(ks[3], (bsz, num_gen, seq_len), jnp.float32),
        "tail_end_logits": jax.random.normal(ks[4], (bsz, num_gen, seq_len), jnp.float32),
    }
    targets = [
        {"relation": jnp.array([1, 3], jnp.int32),
         "head_start_index": jnp.array([2, 5], jnp.int32),
         "head_end_index": jnp.array([4, 7], jnp.int32),
         "tail_start_index": jnp.array([10, 12], jnp.int32),
         "tail_end_index": jnp.array([11, 15], jnp.int32)},
        {"relation": jnp.array([0, 2, 6], jnp.int32),
         "head_start_index": jnp.array([1, 8, 20], jnp.int32),
         "head_end_index": jnp.array([3, 9, 22], jnp.int32),
         "tail_start_index": jnp.array([5, 14, 25], jnp.int32),
         "tail_end_index": jnp.array([6, 16, 28], jnp.int32)},
    ]
    loss_weight = {"relation": 1.0, "head_entity": 2.0, "tail_entity": 2.0}

    indices, cost = hungarian_matcher_forward(outputs, targets, loss_weight, MATCHER)
    jax.block_until_ready(cost)

    # Correctness vs. pure-JAX f32 reference of the kernel's hot path.
    # Tolerance relaxed to 2e-2: matmul operands (softmax probs) are bf16 on
    # the MXU (per-element rel. error ~2^-9) + approx reciprocal in the
    # softmax denominator; accumulation is exact f32.
    ref = np.asarray(_reference_cost(outputs, targets, loss_weight))
    np.testing.assert_allclose(np.asarray(cost), ref, rtol=2e-2, atol=2e-2)

    # Sanity: one (pred_idx, gold_idx) pair list per batch element, and the
    # assignment is optimal (checked vs. brute force at these tiny sizes).
    assert len(indices) == bsz
    cost_np = np.asarray(cost).reshape(bsz, num_gen, -1)
    num_gold = [int(t["relation"].shape[0]) for t in targets]
    chunks = np.split(cost_np, np.cumsum(num_gold)[:-1], axis=-1)
    for b, ((i_idx, j_idx), t) in enumerate(zip(indices, targets)):
        assert len(i_idx) == len(j_idx) == min(num_gen, int(t["relation"].shape[0]))
        block = chunks[b][b]
        if block.shape[1] <= 6:
            assigned = block[i_idx, j_idx].sum()
            assert abs(assigned - _brute_force_optimal_cost(block)) < 1e-5

    print("KERNEL_OK")
</pallas_src>

<mosaic_0001>
module attributes {stable_mosaic.version = 11 : i64} {
  func.func @_cost_kernel(%arg0: i32, %arg1: memref<24x8xf32, #tpu.memory_space<vmem>>, %arg2: memref<24x32xf32, #tpu.memory_space<vmem>>, %arg3: memref<24x32xf32, #tpu.memory_space<vmem>>, %arg4: memref<24x32xf32, #tpu.memory_space<vmem>>, %arg5: memref<24x32xf32, #tpu.memory_space<vmem>>, %arg6: memref<8x128xbf16, #tpu.memory_space<vmem>>, %arg7: memref<32x128xbf16, #tpu.memory_space<vmem>>, %arg8: memref<32x128xbf16, #tpu.memory_space<vmem>>, %arg9: memref<32x128xbf16, #tpu.memory_space<vmem>>, %arg10: memref<32x128xbf16, #tpu.memory_space<vmem>>, %arg11: memref<24x128xf32, #tpu.memory_space<vmem>>) attributes {dimension_semantics = [#tpu.dimension_semantics<parallel>], iteration_bounds = array<i64: 1>, scalar_prefetch = 0 : i64, scratch_operands = 0 : i64, tpu.core_type = #tpu.core_type<tc>, window_params = [{transform_indices = @transform_0, window_bounds = array<i64: 24, 8>}, {transform_indices = @transform_1, window_bounds = array<i64: 24, 32>}, {transform_indices = @transform_2, window_bounds = array<i64: 24, 32>}, {transform_indices = @transform_3, window_bounds = array<i64: 24, 32>}, {transform_indices = @transform_4, window_bounds = array<i64: 24, 32>}, {pipeline_mode = #tpu.pipeline_mode<synchronous>, transform_indices = @transform_5, window_bounds = array<i64: 8, 128>}, {pipeline_mode = #tpu.pipeline_mode<synchronous>, transform_indices = @transform_6, window_bounds = array<i64: 32, 128>}, {pipeline_mode = #tpu.pipeline_mode<synchronous>, transform_indices = @transform_7, window_bounds = array<i64: 32, 128>}, {pipeline_mode = #tpu.pipeline_mode<synchronous>, transform_indices = @transform_8, window_bounds = array<i64: 32, 128>}, {pipeline_mode = #tpu.pipeline_mode<synchronous>, transform_indices = @transform_9, window_bounds = array<i64: 32, 128>}, {transform_indices = @transform_10, window_bounds = array<i64: 24, 128>}]} {
    %c0 = arith.constant 0 : index
    %c0_0 = arith.constant 0 : index
    %0 = vector.load %arg1[%c0, %c0_0] : memref<24x8xf32, #tpu.memory_space<vmem>>, vector<24x8xf32>
    %cst = arith.constant dense<0xFF800000> : vector<24xf32>
    %1 = vector.multi_reduction <maximumf>, %0, %cst [1] : vector<24x8xf32> to vector<24xf32>
    %2 = vector.shape_cast %1 : vector<24xf32> to vector<24x1xf32>
    %3 = vector.broadcast %2 : vector<24x1xf32> to vector<24x8xf32>
    %4 = arith.subf %0, %3 : vector<24x8xf32>
    %5 = math.exp %4 : vector<24x8xf32>
    %cst_1 = arith.constant dense<0.000000e+00> : vector<24xf32>
    %6 = vector.multi_reduction <add>, %5, %cst_1 [1] : vector<24x8xf32> to vector<24xf32>
    %7 = vector.shape_cast %6 : vector<24xf32> to vector<24x1xf32>
    %8 = tpu.reciprocal %7 {approx = true} : vector<24x1xf32> -> vector<24x1xf32>
    %9 = vector.broadcast %8 : vector<24x1xf32> to vector<24x8xf32>
    %10 = arith.mulf %5, %9 : vector<24x8xf32>
    %11 = arith.truncf %10 : vector<24x8xf32> to vector<24x8xbf16>
    %c0_2 = arith.constant 0 : index
    %c0_3 = arith.constant 0 : index
    %12 = vector.load %arg6[%c0_2, %c0_3] : memref<8x128xbf16, #tpu.memory_space<vmem>>, vector<8x128xbf16>
    %cst_4 = arith.constant dense<0.000000e+00> : vector<24x128xf32>
    %13 = tpu.matmul %11, %12, %cst_4 {dimension_numbers = #tpu.dot_dimension_numbers<[1], [0], [0], [1], [0, 0, 1, 1], [], []>} : vector<24x8xbf16>, vector<8x128xbf16>, vector<24x128xf32> -> vector<24x128xf32>
    %c0_5 = arith.constant 0 : index
    %c0_6 = arith.constant 0 : index
    %14 = vector.load %arg2[%c0_5, %c0_6] : memref<24x32xf32, #tpu.memory_space<vmem>>, vector<24x32xf32>
    %cst_7 = arith.constant dense<0xFF800000> : vector<24xf32>
    %15 = vector.multi_reduction <maximumf>, %14, %cst_7 [1] : vector<24x32xf32> to vector<24xf32>
    %16 = vector.shape_cast %15 : vector<24xf32> to vector<24x1xf32>
    %17 = vector.broadcast %16 : vector<24x1xf32> to vector<24x32xf32>
    %18 = arith.subf %14, %17 : vector<24x32xf32>
    %19 = math.exp %18 : vector<24x32xf32>
    %cst_8 = arith.constant dense<0.000000e+00> : vector<24xf32>
    %20 = vector.multi_reduction <add>, %19, %cst_8 [1] : vector<24x32xf32> to vector<24xf32>
    %21 = vector.shape_cast %20 : vector<24xf32> to vector<24x1xf32>
    %22 = tpu.reciprocal %21 {approx = true} : vector<24x1xf32> -> vector<24x1xf32>
    %23 = vector.broadcast %22 : vector<24x1xf32> to vector<24x32xf32>
    %24 = arith.mulf %19, %23 : vector<24x32xf32>
    %25 = arith.truncf %24 : vector<24x32xf32> to vector<24x32xbf16>
    %c0_9 = arith.constant 0 : index
    %c0_10 = arith.constant 0 : index
    %26 = vector.load %arg7[%c0_9, %c0_10] : memref<32x128xbf16, #tpu.memory_space<vmem>>, vector<32x128xbf16>
    %cst_11 = arith.constant dense<0.000000e+00> : vector<24x128xf32>
    %27 = tpu.matmul %25, %26, %cst_11 {dimension_numbers = #tpu.dot_dimension_numbers<[1], [0], [0], [1], [0, 0, 1, 1], [], []>} : vector<24x32xbf16>, vector<32x128xbf16>, vector<24x128xf32> -> vector<24x128xf32>
    %28 = arith.addf %13, %27 : vector<24x128xf32>
    %c0_12 = arith.constant 0 : index
    %c0_13 = arith.constant 0 : index
    %29 = vector.load %arg3[%c0_12, %c0_13] : memref<24x32xf32, #tpu.memory_space<vmem>>, vector<24x32xf32>
    %cst_14 = arith.constant dense<0xFF800000> : vector<24xf32>
    %30 = vector.multi_reduction <maximumf>, %29, %cst_14 [1] : vector<24x32xf32> to vector<24xf32>
    %31 = vector.shape_cast %30 : vector<24xf32> to vector<24x1xf32>
    %32 = vector.broadcast %31 : vector<24x1xf32> to vector<24x32xf32>
    %33 = arith.subf %29, %32 : vector<24x32xf32>
    %34 = math.exp %33 : vector<24x32xf32>
    %cst_15 = arith.constant dense<0.000000e+00> : vector<24xf32>
    %35 = vector.multi_reduction <add>, %34, %cst_15 [1] : vector<24x32xf32> to vector<24xf32>
    %36 = vector.shape_cast %35 : vector<24xf32> to vector<24x1xf32>
    %37 = tpu.reciprocal %36 {approx = true} : vector<24x1xf32> -> vector<24x1xf32>
    %38 = vector.broadcast %37 : vector<24x1xf32> to vector<24x32xf32>
    %39 = arith.mulf %34, %38 : vector<24x32xf32>
    %40 = arith.truncf %39 : vector<24x32xf32> to vector<24x32xbf16>
    %c0_16 = arith.constant 0 : index
    %c0_17 = arith.constant 0 : index
    %41 = vector.load %arg8[%c0_16, %c0_17] : memref<32x128xbf16, #tpu.memory_space<vmem>>, vector<32x128xbf16>
    %cst_18 = arith.constant dense<0.000000e+00> : vector<24x128xf32>
    %42 = tpu.matmul %40, %41, %cst_18 {dimension_numbers = #tpu.dot_dimension_numbers<[1], [0], [0], [1], [0, 0, 1, 1], [], []>} : vector<24x32xbf16>, vector<32x128xbf16>, vector<24x128xf32> -> vector<24x128xf32>
    %43 = arith.addf %28, %42 : vector<24x128xf32>
    %c0_19 = arith.constant 0 : index
    %c0_20 = arith.constant 0 : index
    %44 = vector.load %arg4[%c0_19, %c0_20] : memref<24x32xf32, #tpu.memory_space<vmem>>, vector<24x32xf32>
    %cst_21 = arith.constant dense<0xFF800000> : vector<24xf32>
    %45 = vector.multi_reduction <maximumf>, %44, %cst_21 [1] : vector<24x32xf32> to vector<24xf32>
    %46 = vector.shape_cast %45 : vector<24xf32> to vector<24x1xf32>
    %47 = vector.broadcast %46 : vector<24x1xf32> to vector<24x32xf32>
    %48 = arith.subf %44, %47 : vector<24x32xf32>
    %49 = math.exp %48 : vector<24x32xf32>
    %cst_22 = arith.constant dense<0.000000e+00> : vector<24xf32>
    %50 = vector.multi_reduction <add>, %49, %cst_22 [1] : vector<24x32xf32> to vector<24xf32>
    %51 = vector.shape_cast %50 : vector<24xf32> to vector<24x1xf32>
    %52 = tpu.reciprocal %51 {approx = true} : vector<24x1xf32> -> vector<24x1xf32>
    %53 = vector.broadcast %52 : vector<24x1xf32> to vector<24x32xf32>
    %54 = arith.mulf %49, %53 : vector<24x32xf32>
    %55 = arith.truncf %54 : vector<24x32xf32> to vector<24x32xbf16>
    %c0_23 = arith.constant 0 : index
    %c0_24 = arith.constant 0 : index
    %56 = vector.load %arg9[%c0_23, %c0_24] : memref<32x128xbf16, #tpu.memory_space<vmem>>, vector<32x128xbf16>
    %cst_25 = arith.constant dense<0.000000e+00> : vector<24x128xf32>
    %57 = tpu.matmul %55, %56, %cst_25 {dimension_numbers = #tpu.dot_dimension_numbers<[1], [0], [0], [1], [0, 0, 1, 1], [], []>} : vector<24x32xbf16>, vector<32x128xbf16>, vector<24x128xf32> -> vector<24x128xf32>
    %58 = arith.addf %43, %57 : vector<24x128xf32>
    %c0_26 = arith.constant 0 : index
    %c0_27 = arith.constant 0 : index
    %59 = vector.load %arg5[%c0_26, %c0_27] : memref<24x32xf32, #tpu.memory_space<vmem>>, vector<24x32xf32>
    %cst_28 = arith.constant dense<0xFF800000> : vector<24xf32>
    %60 = vector.multi_reduction <maximumf>, %59, %cst_28 [1] : vector<24x32xf32> to vector<24xf32>
    %61 = vector.shape_cast %60 : vector<24xf32> to vector<24x1xf32>
    %62 = vector.broadcast %61 : vector<24x1xf32> to vector<24x32xf32>
    %63 = arith.subf %59, %62 : vector<24x32xf32>
    %64 = math.exp %63 : vector<24x32xf32>
    %cst_29 = arith.constant dense<0.000000e+00> : vector<24xf32>
    %65 = vector.multi_reduction <add>, %64, %cst_29 [1] : vector<24x32xf32> to vector<24xf32>
    %66 = vector.shape_cast %65 : vector<24xf32> to vector<24x1xf32>
    %67 = tpu.reciprocal %66 {approx = true} : vector<24x1xf32> -> vector<24x1xf32>
    %68 = vector.broadcast %67 : vector<24x1xf32> to vector<24x32xf32>
    %69 = arith.mulf %64, %68 : vector<24x32xf32>
    %70 = arith.truncf %69 : vector<24x32xf32> to vector<24x32xbf16>
    %c0_30 = arith.constant 0 : index
    %c0_31 = arith.constant 0 : index
    %71 = vector.load %arg10[%c0_30, %c0_31] : memref<32x128xbf16, #tpu.memory_space<vmem>>, vector<32x128xbf16>
    %cst_32 = arith.constant dense<0.000000e+00> : vector<24x128xf32>
    %72 = tpu.matmul %70, %71, %cst_32 {dimension_numbers = #tpu.dot_dimension_numbers<[1], [0], [0], [1], [0, 0, 1, 1], [], []>} : vector<24x32xbf16>, vector<32x128xbf16>, vector<24x128xf32> -> vector<24x128xf32>
    %73 = arith.addf %58, %72 : vector<24x128xf32>
    %c0_33 = arith.constant 0 : index
    %c0_34 = arith.constant 0 : index
    %74 = vector.load %arg11[%c0_33, %c0_34] : memref<24x128xf32, #tpu.memory_space<vmem>>, vector<24x128xf32>
    tpu.vector_store %arg11[%c0_33, %c0_34], %73 {strides = array<i32>} : memref<24x128xf32, #tpu.memory_space<vmem>>, vector<24x128xf32>,
    return
  }
  func.func @transform_0(%arg0: i32) -> (i32, i32) {
    %c0_i32 = arith.constant 0 : i32
    %c0_i32_0 = arith.constant 0 : i32
    return %arg0, %c0_i32 : i32, i32
  }
  func.func @transform_1(%arg0: i32) -> (i32, i32) {
    %c0_i32 = arith.constant 0 : i32
    %c0_i32_0 = arith.constant 0 : i32
    return %arg0, %c0_i32 : i32, i32
  }
  func.func @transform_2(%arg0: i32) -> (i32, i32) {
    %c0_i32 = arith.constant 0 : i32
    %c0_i32_0 = arith.constant 0 : i32
    return %arg0, %c0_i32 : i32, i32
  }
  func.func @transform_3(%arg0: i32) -> (i32, i32) {
    %c0_i32 = arith.constant 0 : i32
    %c0_i32_0 = arith.constant 0 : i32
    return %arg0, %c0_i32 : i32, i32
  }
  func.func @transform_4(%arg0: i32) -> (i32, i32) {
    %c0_i32 = arith.constant 0 : i32
    %c0_i32_0 = arith.constant 0 : i32
    return %arg0, %c0_i32 : i32, i32
  }
  func.func @transform_5(%arg0: i32) -> (i32, i32) {
    %c0_i32 = arith.constant 0 : i32
    %c0_i32_0 = arith.constant 0 : i32
    %c0_i32_1 = arith.constant 0 : i32
    return %c0_i32, %c0_i32_0 : i32, i32
  }
  func.func @transform_6(%arg0: i32) -> (i32, i32) {
    %c0_i32 = arith.constant 0 : i32
    %c0_i32_0 = arith.constant 0 : i32
    %c0_i32_1 = arith.constant 0 : i32
    return %c0_i32, %c0_i32_0 : i32, i32
  }
  func.func @transform_7(%arg0: i32) -> (i32, i32) {
    %c0_i32 = arith.constant 0 : i32
    %c0_i32_0 = arith.constant 0 : i32
    %c0_i32_1 = arith.constant 0 : i32
    return %c0_i32, %c0_i32_0 : i32, i32
  }
  func.func @transform_8(%arg0: i32) -> (i32, i32) {
    %c0_i32 = arith.constant 0 : i32
    %c0_i32_0 = arith.constant 0 : i32
    %c0_i32_1 = arith.constant 0 : i32
    return %c0_i32, %c0_i32_0 : i32, i32
  }
  func.func @transform_9(%arg0: i32) -> (i32, i32) {
    %c0_i32 = arith.constant 0 : i32
    %c0_i32_0 = arith.constant 0 : i32
    %c0_i32_1 = arith.constant 0 : i32
    return %c0_i32, %c0_i32_0 : i32, i32
  }
  func.func @transform_10(%arg0: i32) -> (i32, i32) {
    %c0_i32 = arith.constant 0 : i32
    %c0_i32_0 = arith.constant 0 : i32
    return %arg0, %c0_i32 : i32, i32
  }
}

</mosaic_0001>

<llo_original>
// kernel: tpu_custom_call.1
$region0: #{tpu_custom_call.1}
  #allocation0 [shape = 'u32[]', space=smem, size = 0x4, offset = 0x4, fixed_abs, tag = 'smem constant byte address 0x4 - core index']
  #allocation1 [shape = 'u32[144,128]{1,0:T(1,128)}', space=vmem, size = 0x12000, scoped, tag = 'internal scratch']
  %s0 = inlined_call_operand.vmem [shape: f32[20,8], index: 0, kind: input, shape index: {}]
  %s1 = inlined_call_operand.vmem [shape: f32[20,32], index: 1, kind: input, shape index: {}]
  %s2 = inlined_call_operand.hbm [shape: f32[20,32], index: 2, kind: input, shape index: {}]
  %s3 = inlined_call_operand.hbm [shape: f32[20,32], index: 3, kind: input, shape index: {}]
  %s4 = inlined_call_operand.hbm [shape: f32[20,32], index: 4, kind: input, shape index: {}]
  %s5 = inlined_call_operand.hbm [shape: bf16[8,128], index: 5, kind: input, shape index: {}]
  %s6 = inlined_call_operand.vmem [shape: bf16[32,128], index: 6, kind: input, shape index: {}]
  %s7 = inlined_call_operand.vmem [shape: bf16[32,128], index: 7, kind: input, shape index: {}]
  %s8 = inlined_call_operand.hbm [shape: bf16[32,128], index: 8, kind: input, shape index: {}]
  %s9 = inlined_call_operand.hbm [shape: bf16[32,128], index: 9, kind: input, shape index: {}]
  %s10 = inlined_call_operand.hbm [shape: f32[20,128], index: 10, kind: output, shape index: {}]
  %s11 = sld [smem:[#allocation0]]
  $region74: #{tpu_custom_call.1} parent=0
    _
  %s13 = ssub.s32 1, %s11
  %s14 = scalar_select 0, %s13, %s11
  $region1: #{tpu_custom_call.1} parent=0
    #allocation2 [shape = 'u8[12288]{0}', space=vmem, size = 0x3000, scoped, tag = 'input window, operand 2, single buffered']
    #allocation3 [shape = 's32[1]{0}', space=sflag, size = 0x4, scoped, tag = 'scoped memory for tpu_custom_call.1']
    #allocation4 [shape = 's32[1]{0}', space=sflag, size = 0x4, scoped, tag = 'scoped memory for tpu_custom_call.1']
    #allocation5 [shape = 'u8[12288]{0}', space=vmem, size = 0x3000, scoped, tag = 'input window, operand 3, single buffered']
    #allocation6 [shape = 's32[1]{0}', space=sflag, size = 0x4, scoped, tag = 'scoped memory for tpu_custom_call.1']
    #allocation7 [shape = 'u8[12288]{0}', space=vmem, size = 0x3000, scoped, tag = 'input window, operand 4, single buffered']
    #allocation8 [shape = 'u8[2048]{0}', space=vmem, size = 0x800, scoped, tag = 'input window, operand 5, single buffered']
    #allocation9 [shape = 's32[1]{0}', space=sflag, size = 0x4, scoped, tag = 'scoped memory for tpu_custom_call.1']
    #allocation10 [shape = 'u8[8192]{0}', space=vmem, size = 0x2000, scoped, tag = 'input window, operand 8, single buffered']
    #allocation11 [shape = 'u8[8192]{0}', space=vmem, size = 0x2000, scoped, tag = 'input window, operand 9, single buffered']
    #allocation12 [shape = 's32[1]{0}', space=sflag, size = 0x4, scoped, tag = 'scoped memory for tpu_custom_call.1']
    #allocation13 [shape = 'u8[12288]{0}', space=vmem, size = 0x3000, scoped, tag = 'output window, operand 0, single buffered']
    %15 = vsyncpa [#allocation3], 0
    %16 = vsyncpa [#allocation6], 0
    %17 = vsyncpa [#allocation9], 0
    %18 = vsyncpa [#allocation12], 0
    %19 = vsyncpa [#allocation4], 0
    // Predicated region
    $region2: #{tpu_custom_call.1} parent=1 // pred_check
      _
    $region3: #{tpu_custom_call.1} parent=1 // pred_check_branch
      %21 = sbr.rel (0) target = $region5
    $region4: #{tpu_custom_call.1} parent=1 // pred_region
      _
    $region5: #{tpu_custom_call.1} parent=1 // pred_fallthru
      _
    // Predicated region
    $region6: #{tpu_custom_call.1} parent=1 // pred_check
      _
    $region7: #{tpu_custom_call.1} parent=1 // pred_check_branch
      %23 = sbr.rel (0) target = $region9
    $region8: #{tpu_custom_call.1} parent=1 // pred_region
      _
    $region9: #{tpu_custom_call.1} parent=1 // pred_fallthru
      _
    // Predicated region
    $region10: #{tpu_custom_call.1} parent=1 // pred_check
      _
    $region11: #{tpu_custom_call.1} parent=1 // pred_check_branch
      %25 = sbr.rel (0) target = $region13
    $region12: #{tpu_custom_call.1} parent=1 // pred_region
      %s27 = ssub.s32 384, 384
      %28 = vsyncadd [#allocation3], %s27
      %s29 = sshll.u32 [#allocation2], 4
      %s30 = int_to_ptr.vmem [resolvable:$true] %s29
      %35 = dma.hbm_to_vmem [thread:$0]  %s2, 384, %s30, [#allocation3], 128, 128, 8
    $region13: #{tpu_custom_call.1} parent=1 // pred_fallthru
      _
    // Predicated region
    $region14: #{tpu_custom_call.1} parent=1 // pred_check
      _
    $region15: #{tpu_custom_call.1} parent=1 // pred_check_branch
      %37 = sbr.rel (0) target = $region17
    $region16: #{tpu_custom_call.1} parent=1 // pred_region
      %s39 = ssub.s32 384, 384
      %40 = vsyncadd [#allocation6], %s39
      %s41 = sshll.u32 [#allocation5], 4
      %s42 = int_to_ptr.vmem [resolvable:$true] %s41
      %47 = dma.hbm_to_vmem [thread:$0]  %s3, 384, %s42, [#allocation6], 128, 128, 8
    $region17: #{tpu_custom_call.1} parent=1 // pred_fallthru
      _
    // Predicated region
    $region18: #{tpu_custom_call.1} parent=1 // pred_check
      _
    $region19: #{tpu_custom_call.1} parent=1 // pred_check_branch
      %49 = sbr.rel (0) target = $region21
    $region20: #{tpu_custom_call.1} parent=1 // pred_region
      %s51 = ssub.s32 384, 384
      %52 = vsyncadd [#allocation6], %s51
      %s53 = sshll.u32 [#allocation7], 4
      %s54 = int_to_ptr.vmem [resolvable:$true] %s53
      %59 = dma.hbm_to_vmem [thread:$0]  %s4, 384, %s54, [#allocation6], 128, 128, 8
    $region21: #{tpu_custom_call.1} parent=1 // pred_fallthru
      _
    // Predicated region
    $region22: #{tpu_custom_call.1} parent=1 // pred_check
      _
    $region23: #{tpu_custom_call.1} parent=1 // pred_check_branch
      %61 = sbr.rel (0) target = $region25
    $region24: #{tpu_custom_call.1} parent=1 // pred_region
      %s63 = ssub.s32 64, 64
      %64 = vsyncadd [#allocation9], %s63
      %s66 = sshll.u32 [#allocation8], 4
      %s67 = int_to_ptr.vmem [resolvable:$true] %s66
      %69 = dma.hbm_to_vmem [thread:$0]  %s5, 64, %s67, [#allocation9]
    $region25: #{tpu_custom_call.1} parent=1 // pred_fallthru
      _
    // Predicated region
    $region26: #{tpu_custom_call.1} parent=1 // pred_check
      _
    $region27: #{tpu_custom_call.1} parent=1 // pred_check_branch
      %71 = sbr.rel (0) target = $region29
    $region28: #{tpu_custom_call.1} parent=1 // pred_region
      _
    $region29: #{tpu_custom_call.1} parent=1 // pred_fallthru
      _
    // Predicated region
    $region30: #{tpu_custom_call.1} parent=1 // pred_check
      _
    $region31: #{tpu_custom_call.1} parent=1 // pred_check_branch
      %73 = sbr.rel (0) target = $region33
    $region32: #{tpu_custom_call.1} parent=1 // pred_region
      _
    $region33: #{tpu_custom_call.1} parent=1 // pred_fallthru
      _
    // Predicated region
    $region34: #{tpu_custom_call.1} parent=1 // pred_check
      _
    $region35: #{tpu_custom_call.1} parent=1 // pred_check_branch
      %75 = sbr.rel (0) target = $region37
    $region36: #{tpu_custom_call.1} parent=1 // pred_region
      %s77 = ssub.s32 256, 256
      %78 = vsyncadd [#allocation9], %s77
      %s79 = sshll.u32 [#allocation10], 4
      %s80 = int_to_ptr.vmem [resolvable:$true] %s79
      %85 = dma.hbm_to_vmem [thread:$0]  %s8, 256, %s80, [#allocation9], 64, 64, 4
    $region37: #{tpu_custom_call.1} parent=1 // pred_fallthru
      _
    // Predicated region
    $region38: #{tpu_custom_call.1} parent=1 // pred_check
      _
    $region39: #{tpu_custom_call.1} parent=1 // pred_check_branch
      %87 = sbr.rel (0) target = $region41
    $region40: #{tpu_custom_call.1} parent=1 // pred_region
      %s89 = ssub.s32 256, 256
      %90 = vsyncadd [#allocation12], %s89
      %s91 = sshll.u32 [#allocation11], 4
      %s92 = int_to_ptr.vmem [resolvable:$true] %s91
      %97 = dma.hbm_to_vmem [thread:$0]  %s9, 256, %s92, [#allocation12], 64, 64, 4
    $region41: #{tpu_custom_call.1} parent=1 // pred_fallthru
      _
    // Predicated region
    $region42: #{tpu_custom_call.1} parent=1 // pred_check
      _
    $region43: #{tpu_custom_call.1} parent=1 // pred_check_branch
      %99 = sbr.rel (0) target = $region45
    $region44: #{tpu_custom_call.1} parent=1 // pred_region
      %100 = dma.done [#allocation3], 384
    $region45: #{tpu_custom_call.1} parent=1 // pred_fallthru
      _
    // Predicated region
    $region46: #{tpu_custom_call.1} parent=1 // pred_check
      _
    $region47: #{tpu_custom_call.1} parent=1 // pred_check_branch
      %102 = sbr.rel (0) target = $region49
    $region48: #{tpu_custom_call.1} parent=1 // pred_region
      %103 = dma.done [#allocation6], 384
    $region49: #{tpu_custom_call.1} parent=1 // pred_fallthru
      _
    // Predicated region
    $region50: #{tpu_custom_call.1} parent=1 // pred_check
      _
    $region51: #{tpu_custom_call.1} parent=1 // pred_check_branch
      %105 = sbr.rel (0) target = $region53
    $region52: #{tpu_custom_call.1} parent=1 // pred_region
      %106 = dma.done [#allocation6], 384
    $region53: #{tpu_custom_call.1} parent=1 // pred_fallthru
      _
    // Predicated region
    $region54: #{tpu_custom_call.1} parent=1 // pred_check
      _
    $region55: #{tpu_custom_call.1} parent=1 // pred_check_branch
      %108 = sbr.rel (0) target = $region57
    $region56: #{tpu_custom_call.1} parent=1 // pred_region
      %109 = dma.done [#allocation9], 64
    $region57: #{tpu_custom_call.1} parent=1 // pred_fallthru
      _
    // Predicated region
    $region58: #{tpu_custom_call.1} parent=1 // pred_check
      _
    $region59: #{tpu_custom_call.1} parent=1 // pred_check_branch
      %111 = sbr.rel (0) target = $region61
    $region60: #{tpu_custom_call.1} parent=1 // pred_region
      %112 = dma.done [#allocation9], 256
    $region61: #{tpu_custom_call.1} parent=1 // pred_fallthru
      _
    // Predicated region
    $region62: #{tpu_custom_call.1} parent=1 // pred_check
      _
    $region63: #{tpu_custom_call.1} parent=1 // pred_check_branch
      %114 = sbr.rel (0) target = $region65
    $region64: #{tpu_custom_call.1} parent=1 // pred_region
      %115 = dma.done [#allocation12], 256
    $region65: #{tpu_custom_call.1} parent=1 // pred_fallthru
      _
    %v117 = vld [vmem:[%s0] sm:$0xff]
    %v118 = vld [vmem:[%s0 + $0x8] sm:$0xff]
    %v119 = vld [vmem:[%s0 + $0x10] sm:$0xff]
    %vm120 = vcmask 64512
    %v121 = vsel %vm120, %v117, -inf
    %122 = vmax.xlane.f32.xlu0 %v121
    %v123 = vpop.xlane.xlu0 %122
    %v124 = vsel %vm120, %v118, -inf
    %125 = vmax.xlane.f32.xlu0 %v124
    %v126 = vpop.xlane.xlu0 %125
    %v127 = vsel %vm120, %v119, -inf
    %128 = vmax.xlane.f32.xlu0 %v127
    %v129 = vpop.xlane.xlu0 %128
    %v130 = vsub.f32 %v117, %v123
    %v131 = vsub.f32 %v118, %v126
    %v132 = vsub.f32 %v119, %v129
    %v133 = vmul.f32 %v130, 1.442695
    %v134 = vpow.pop %v133
    %v135 = vmul.f32 %v131, 1.442695
    %v136 = vpow.pop %v135
    %v137 = vmul.f32 %v132, 1.442695
    %v138 = vpow.pop %v137
    %v139 = vsel %vm120, %v134, 0.0
    %140 = vadd.xlane.f32.xlu0 %v139
    %v141 = vpop.xlane.xlu0 %140
    %v142 = vsel %vm120, %v136, 0.0
    %143 = vadd.xlane.f32.xlu0 %v142
    %v144 = vpop.xlane.xlu0 %143
    %v145 = vsel %vm120, %v138, 0.0
    %146 = vadd.xlane.f32.xlu0 %v145
    %v147 = vpop.xlane.xlu0 %146
    %v148 = vrcp.pop %v141
    %v149 = vrcp.pop %v144
    %v150 = vrcp.pop %v147
    %v151 = vmul.f32 %v134, %v148
    %v152 = vmul.f32 %v136, %v149
    %v153 = vmul.f32 %v138, %v150
    %v154 = vpack.c.bf16 %v152, %v151
    %v155 = vpack.c.bf16 %v153, %v153
    %v156 = vld [vmem:[#allocation8] sm:$0xf]
    %v157 = vld [vmem:[%s1] sm:$0xff]
    %v158 = vld [vmem:[%s1 + $0x8] sm:$0xff]
    %v159 = vld [vmem:[%s1 + $0x10] sm:$0xff]
    %vm160 = vcmask 261120
    %v161 = vsel %vm160, %v157, -inf
    %162 = vmax.xlane.f32.xlu0 %v161
    %v163 = vpop.xlane.xlu0 %162
    %v164 = vsel %vm160, %v158, -inf
    %165 = vmax.xlane.f32.xlu0 %v164
    %v166 = vpop.xlane.xlu0 %165
    %v167 = vsel %vm160, %v159, -inf
    %168 = vmax.xlane.f32.xlu0 %v167
    %v169 = vpop.xlane.xlu0 %168
    %v170 = vsub.f32 %v157, %v163
    %v171 = vsub.f32 %v158, %v166
    %v172 = vsub.f32 %v159, %v169
    %v173 = vmul.f32 %v170, 1.442695
    %v174 = vpow.pop %v173
    %v175 = vmul.f32 %v171, 1.442695
    %v176 = vpow.pop %v175
    %v177 = vmul.f32 %v172, 1.442695
    %v178 = vpow.pop %v177
    %v179 = vsel %vm160, %v174, 0.0
    %180 = vadd.xlane.f32.xlu0 %v179
    %v181 = vpop.xlane.xlu0 %180
    %v182 = vsel %vm160, %v176, 0.0
    %183 = vadd.xlane.f32.xlu0 %v182
    %v184 = vpop.xlane.xlu0 %183
    %v185 = vsel %vm160, %v178, 0.0
    %186 = vadd.xlane.f32.xlu0 %v185
    %v187 = vpop.xlane.xlu0 %186
    %v188 = vrcp.pop %v181
    %v189 = vrcp.pop %v184
    %v190 = vrcp.pop %v187
    %v191 = vmul.f32 %v174, %v188
    %v192 = vmul.f32 %v176, %v189
    %v193 = vmul.f32 %v178, %v190
    %v194 = vpack.c.bf16 %v192, %v191
    %v195 = vpack.c.bf16 %v193, %v193
    %v196 = vld [vmem:[%s6] sm:$0xf]
    %v197 = vld [vmem:[%s6 + $0x4] sm:$0xf]
    %v198 = vld [vmem:[%s6 + $0x8] sm:$0xf]
    %v199 = vld [vmem:[%s6 + $0xc] sm:$0xf]
    %v204 = vunpack.c.l.b16 %v196
    %v205 = vunpack.c.l.b16 %v197
    %v206 = vunpack.c.l.b16 %v198
    %v207 = vunpack.c.l.b16 %v199
    %v208 = vpack.c.b16 %v205, %v204
    %v209 = vpack.c.b16 %v207, %v206
    %v213 = vsel %vm160, %v194, 0
    %v216 = vsel %vm160, %v195, 0
    %218 = vmatprep.subr.bf16.mxu0 0
    %219 = vmatpush1.bf16.msra.mxu0 %v208
    %220 = vmatprep.subr.bf16.mxu0 0
    %221 = vmatpush1.bf16.msra.mxu0 %v209
    %222 = vmatprep.subr.bf16.mxu0 0
    %223 = vmatpush1.bf16.msra.mxu0 0
    %224 = vmatprep.subr.bf16.mxu0 0
    %225 = vmatpush1.bf16.msra.mxu0 0
    %226 = vmatprep.subr.bf16.mxu0 0
    %227 = vmatpush1.bf16.msra.mxu0 0
    %228 = vmatprep.subr.bf16.mxu0 0
    %229 = vmatpush1.bf16.msra.mxu0 0
    %230 = vmatprep.subr.bf16.mxu0 0
    %231 = vmatpush1.bf16.msra.mxu0 0
    %232 = vmatprep.subr.bf16.mxu0 0
    %233 = vmatpush1.bf16.msra.mxu0 0
    %234 = vmatprep.subr.bf16.mxu0 0
    %235 = vmatpush1.bf16.msra.mxu0 0
    %236 = vmatprep.subr.bf16.mxu0 0
    %237 = vmatpush1.bf16.msra.mxu0 0
    %238 = vmatprep.subr.bf16.mxu0 0
    %239 = vmatpush1.bf16.msra.mxu0 0
    %240 = vmatprep.subr.bf16.mxu0 0
    %241 = vmatpush1.bf16.msra.mxu0 0
    %242 = vmatprep.subr.bf16.mxu0 0
    %243 = vmatpush1.bf16.msra.mxu0 0
    %244 = vmatprep.subr.bf16.mxu0 0
    %245 = vmatpush1.bf16.msra.mxu0 0
    %246 = vmatprep.subr.bf16.mxu0 0
    %247 = vmatpush1.bf16.msra.mxu0 0
    %248 = vmatprep.subr.bf16.mxu0 0
    %249 = vmatpush1.bf16.msra.mxu0 0
    %250 = vmatprep.mubr.bf16.mxu0 0
    %251 = vmatmul.mubr.bf16.gmra.mrb[0].mxu0 %v213
    %v252 = vpop.f32.mrb[0].mxu0
    %v253 = vadd.f32 0.0, %v252
    %v254 = vpop.f32.mrb[0].mxu0
    %v255 = vpop.f32.mrb[0].mxu0
    %v256 = vadd.f32 0.0, %v255
    %v257 = vpop.f32.mrb[0].mxu0
    %258 = vmatprep.mubr.bf16.mxu0 0
    %259 = vmatmul.mubr.bf16.gmra.mrb[0].mxu0 %v216
    %v260 = vpop.f32.mrb[0].mxu0
    %v261 = vadd.f32 0.0, %v260
    %v262 = vpop.f32.mrb[0].mxu0
    %v263 = vpop.f32.mrb[0].mxu0
    %v264 = vpop.f32.mrb[0].mxu0
    %265 = vdwg.mxu0
    %v267 = vsel %vm120, %v154, 0
    %v270 = vsel %vm120, %v155, 0
    %vm272 = vcmask 1043456
    %v274 = vsel %vm272, %v156, 0
    %276 = vmatprep.subr.bf16.mxu0 0
    %277 = vmatpush1.bf16.msra.mxu0 %v274
    %278 = vmatprep.subr.bf16.mxu0 0
    %279 = vmatpush1.bf16.msra.mxu0 0
    %280 = vmatprep.subr.bf16.mxu0 0
    %281 = vmatpush1.bf16.msra.mxu0 0
    %282 = vmatprep.subr.bf16.mxu0 0
    %283 = vmatpush1.bf16.msra.mxu0 0
    %284 = vmatprep.subr.bf16.mxu0 0
    %285 = vmatpush1.bf16.msra.mxu0 0
    %286 = vmatprep.subr.bf16.mxu0 0
    %287 = vmatpush1.bf16.msra.mxu0 0
    %288 = vmatprep.subr.bf16.mxu0 0
    %289 = vmatpush1.bf16.msra.mxu0 0
    %290 = vmatprep.subr.bf16.mxu0 0
    %291 = vmatpush1.bf16.msra.mxu0 0
    %292 = vmatprep.subr.bf16.mxu0 0
    %293 = vmatpush1.bf16.msra.mxu0 0
    %294 = vmatprep.subr.bf16.mxu0 0
    %295 = vmatpush1.bf16.msra.mxu0 0
    %296 = vmatprep.subr.bf16.mxu0 0
    %297 = vmatpush1.bf16.msra.mxu0 0
    %298 = vmatprep.subr.bf16.mxu0 0
    %299 = vmatpush1.bf16.msra.mxu0 0
    %300 = vmatprep.subr.bf16.mxu0 0
    %301 = vmatpush1.bf16.msra.mxu0 0
    %302 = vmatprep.subr.bf16.mxu0 0
    %303 = vmatpush1.bf16.msra.mxu0 0
    %304 = vmatprep.subr.bf16.mxu0 0
    %305 = vmatpush1.bf16.msra.mxu0 0
    %306 = vmatprep.subr.bf16.mxu0 0
    %307 = vmatpush1.bf16.msra.mxu0 0
    %308 = vmatprep.mubr.bf16.mxu0 0
    %309 = vmatmul.mubr.bf16.gmra.mrb[0].mxu0 %v267
    %v310 = vpop.f32.mrb[0].mxu0
    %v311 = vadd.f32 %v253, %v310
    %v312 = vpop.f32.mrb[0].mxu0
    %v313 = vpop.f32.mrb[0].mxu0
    %v314 = vadd.f32 %v256, %v313
    %v315 = vpop.f32.mrb[0].mxu0
    %316 = vmatprep.mubr.bf16.mxu0 0
    %317 = vmatmul.mubr.bf16.gmra.mrb[0].mxu0 %v270
    %v318 = vpop.f32.mrb[0].mxu0
    %v319 = vadd.f32 %v261, %v318
    %v320 = vpop.f32.mrb[0].mxu0
    %v321 = vpop.f32.mrb[0].mxu0
    %v322 = vpop.f32.mrb[0].mxu0
    %323 = vdwg.mxu0
    %v324 = vld [vmem:[#allocation2] sm:$0xff]
    %v325 = vld [vmem:[#allocation2 + $0x8] sm:$0xff]
    %v326 = vld [vmem:[#allocation2 + $0x10] sm:$0xff]
    %v327 = vsel %vm160, %v324, -inf
    %328 = vmax.xlane.f32.xlu0 %v327
    %v329 = vpop.xlane.xlu0 %328
    %v330 = vsel %vm160, %v325, -inf
    %331 = vmax.xlane.f32.xlu0 %v330
    %v332 = vpop.xlane.xlu0 %331
    %v333 = vsel %vm160, %v326, -inf
    %334 = vmax.xlane.f32.xlu0 %v333
    %v335 = vpop.xlane.xlu0 %334
    %v336 = vsub.f32 %v324, %v329
    %v337 = vsub.f32 %v325, %v332
    %v338 = vsub.f32 %v326, %v335
    %v339 = vmul.f32 %v336, 1.442695
    %v340 = vpow.pop %v339
    %v341 = vmul.f32 %v337, 1.442695
    %v342 = vpow.pop %v341
    %v343 = vmul.f32 %v338, 1.442695
    %v344 = vpow.pop %v343
    %v345 = vsel %vm160, %v340, 0.0
    %346 = vadd.xlane.f32.xlu0 %v345
    %v347 = vpop.xlane.xlu0 %346
    %v348 = vsel %vm160, %v342, 0.0
    %349 = vadd.xlane.f32.xlu0 %v348
    %v350 = vpop.xlane.xlu0 %349
    %v351 = vsel %vm160, %v344, 0.0
    %352 = vadd.xlane.f32.xlu0 %v351
    %v353 = vpop.xlane.xlu0 %352
    %v354 = vrcp.pop %v347
    %v355 = vrcp.pop %v350
    %v356 = vrcp.pop %v353
    %v357 = vmul.f32 %v340, %v354
    %v358 = vmul.f32 %v342, %v355
    %v359 = vmul.f32 %v344, %v356
    %v360 = vpack.c.bf16 %v358, %v357
    %v361 = vpack.c.bf16 %v359, %v359
    %v362 = vld [vmem:[%s7] sm:$0xf]
    %v363 = vld [vmem:[%s7 + $0x4] sm:$0xf]
    %v364 = vld [vmem:[%s7 + $0x8] sm:$0xf]
    %v365 = vld [vmem:[%s7 + $0xc] sm:$0xf]
    %v370 = vunpack.c.l.b16 %v362
    %v371 = vunpack.c.l.b16 %v363
    %v372 = vunpack.c.l.b16 %v364
    %v373 = vunpack.c.l.b16 %v365
    %v374 = vpack.c.b16 %v371, %v370
    %v375 = vpack.c.b16 %v373, %v372
    %v379 = vsel %vm160, %v360, 0
    %v382 = vsel %vm160, %v361, 0
    %384 = vmatprep.subr.bf16.mxu0 0
    %385 = vmatpush1.bf16.msra.mxu0 %v374
    %386 = vmatprep.subr.bf16.mxu0 0
    %387 = vmatpush1.bf16.msra.mxu0 %v375
    %388 = vmatprep.subr.bf16.mxu0 0
    %389 = vmatpush1.bf16.msra.mxu0 0
    %390 = vmatprep.subr.bf16.mxu0 0
    %391 = vmatpush1.bf16.msra.mxu0 0
    %392 = vmatprep.subr.bf16.mxu0 0
    %393 = vmatpush1.bf16.msra.mxu0 0
    %394 = vmatprep.subr.bf16.mxu0 0
    %395 = vmatpush1.bf16.msra.mxu0 0
    %396 = vmatprep.subr.bf16.mxu0 0
    %397 = vmatpush1.bf16.msra.mxu0 0
    %398 = vmatprep.subr.bf16.mxu0 0
    %399 = vmatpush1.bf16.msra.mxu0 0
    %400 = vmatprep.subr.bf16.mxu0 0
    %401 = vmatpush1.bf16.msra.mxu0 0
    %402 = vmatprep.subr.bf16.mxu0 0
    %403 = vmatpush1.bf16.msra.mxu0 0
    %404 = vmatprep.subr.bf16.mxu0 0
    %405 = vmatpush1.bf16.msra.mxu0 0
    %406 = vmatprep.subr.bf16.mxu0 0
    %407 = vmatpush1.bf16.msra.mxu0 0
    %408 = vmatprep.subr.bf16.mxu0 0
    %409 = vmatpush1.bf16.msra.mxu0 0
    %410 = vmatprep.subr.bf16.mxu0 0
    %411 = vmatpush1.bf16.msra.mxu0 0
    %412 = vmatprep.subr.bf16.mxu0 0
    %413 = vmatpush1.bf16.msra.mxu0 0
    %414 = vmatprep.subr.bf16.mxu0 0
    %415 = vmatpush1.bf16.msra.mxu0 0
    %416 = vmatprep.mubr.bf16.mxu0 0
    %417 = vmatmul.mubr.bf16.gmra.mrb[0].mxu0 %v379
    %v418 = vpop.f32.mrb[0].mxu0
    %v419 = vadd.f32 0.0, %v418
    %v420 = vpop.f32.mrb[0].mxu0
    %v421 = vpop.f32.mrb[0].mxu0
    %v422 = vadd.f32 0.0, %v421
    %v423 = vpop.f32.mrb[0].mxu0
    %424 = vmatprep.mubr.bf16.mxu0 0
    %425 = vmatmul.mubr.bf16.gmra.mrb[0].mxu0 %v382
    %v426 = vpop.f32.mrb[0].mxu0
    %v427 = vadd.f32 0.0, %v426
    %v428 = vpop.f32.mrb[0].mxu0
    %v429 = vpop.f32.mrb[0].mxu0
    %v430 = vpop.f32.mrb[0].mxu0
    %431 = vdwg.mxu0
    %v432 = vadd.f32 %v311, %v419
    %v433 = vadd.f32 %v314, %v422
    %v434 = vadd.f32 %v319, %v427
    %v435 = vld [vmem:[#allocation5] sm:$0xff]
    %v436 = vld [vmem:[#allocation5 + $0x8] sm:$0xff]
    %v437 = vld [vmem:[#allocation5 + $0x10] sm:$0xff]
    %v438 = vsel %vm160, %v435, -inf
    %439 = vmax.xlane.f32.xlu0 %v438
    %v440 = vpop.xlane.xlu0 %439
    %v441 = vsel %vm160, %v436, -inf
    %442 = vmax.xlane.f32.xlu0 %v441
    %v443 = vpop.xlane.xlu0 %442
    %v444 = vsel %vm160, %v437, -inf
    %445 = vmax.xlane.f32.xlu0 %v444
    %v446 = vpop.xlane.xlu0 %445
    %v447 = vsub.f32 %v435, %v440
    %v448 = vsub.f32 %v436, %v443
    %v449 = vsub.f32 %v437, %v446
    %v450 = vmul.f32 %v447, 1.442695
    %v451 = vpow.pop %v450
    %v452 = vmul.f32 %v448, 1.442695
    %v453 = vpow.pop %v452
    %v454 = vmul.f32 %v449, 1.442695
    %v455 = vpow.pop %v454
    %v456 = vsel %vm160, %v451, 0.0
    %457 = vadd.xlane.f32.xlu0 %v456
    %v458 = vpop.xlane.xlu0 %457
    %v459 = vsel %vm160, %v453, 0.0
    %460 = vadd.xlane.f32.xlu0 %v459
    %v461 = vpop.xlane.xlu0 %460
    %v462 = vsel %vm160, %v455, 0.0
    %463 = vadd.xlane.f32.xlu0 %v462
    %v464 = vpop.xlane.xlu0 %463
    %v465 = vrcp.pop %v458
    %v466 = vrcp.pop %v461
    %v467 = vrcp.pop %v464
    %v468 = vmul.f32 %v451, %v465
    %v469 = vmul.f32 %v453, %v466
    %v470 = vmul.f32 %v455, %v467
    %v471 = vpack.c.bf16 %v469, %v468
    %v472 = vpack.c.bf16 %v470, %v470
    %v473 = vld [vmem:[#allocation10] sm:$0xf]
    %v474 = vld [vmem:[#allocation10 + $0x4] sm:$0xf]
    %v475 = vld [vmem:[#allocation10 + $0x8] sm:$0xf]
    %v476 = vld [vmem:[#allocation10 + $0xc] sm:$0xf]
    %v481 = vunpack.c.l.b16 %v473
    %v482 = vunpack.c.l.b16 %v474
    %v483 = vunpack.c.l.b16 %v475
    %v484 = vunpack.c.l.b16 %v476
    %v485 = vpack.c.b16 %v482, %v481
    %v486 = vpack.c.b16 %v484, %v483
    %v490 = vsel %vm160, %v471, 0
    %v493 = vsel %vm160, %v472, 0
    %495 = vmatprep.subr.bf16.mxu0 0
    %496 = vmatpush1.bf16.msra.mxu0 %v485
    %497 = vmatprep.subr.bf16.mxu0 0
    %498 = vmatpush1.bf16.msra.mxu0 %v486
    %499 = vmatprep.subr.bf16.mxu0 0
    %500 = vmatpush1.bf16.msra.mxu0 0
    %501 = vmatprep.subr.bf16.mxu0 0
    %502 = vmatpush1.bf16.msra.mxu0 0
    %503 = vmatprep.subr.bf16.mxu0 0
    %504 = vmatpush1.bf16.msra.mxu0 0
    %505 = vmatprep.subr.bf16.mxu0 0
    %506 = vmatpush1.bf16.msra.mxu0 0
    %507 = vmatprep.subr.bf16.mxu0 0
    %508 = vmatpush1.bf16.msra.mxu0 0
    %509 = vmatprep.subr.bf16.mxu0 0
    %510 = vmatpush1.bf16.msra.mxu0 0
    %511 = vmatprep.subr.bf16.mxu0 0
    %512 = vmatpush1.bf16.msra.mxu0 0
    %513 = vmatprep.subr.bf16.mxu0 0
    %514 = vmatpush1.bf16.msra.mxu0 0
    %515 = vmatprep.subr.bf16.mxu0 0
    %516 = vmatpush1.bf16.msra.mxu0 0
    %517 = vmatprep.subr.bf16.mxu0 0
    %518 = vmatpush1.bf16.msra.mxu0 0
    %519 = vmatprep.subr.bf16.mxu0 0
    %520 = vmatpush1.bf16.msra.mxu0 0
    %521 = vmatprep.subr.bf16.mxu0 0
    %522 = vmatpush1.bf16.msra.mxu0 0
    %523 = vmatprep.subr.bf16.mxu0 0
    %524 = vmatpush1.bf16.msra.mxu0 0
    %525 = vmatprep.subr.bf16.mxu0 0
    %526 = vmatpush1.bf16.msra.mxu0 0
    %527 = vmatprep.mubr.bf16.mxu0 0
    %528 = vmatmul.mubr.bf16.gmra.mrb[0].mxu0 %v490
    %v529 = vpop.f32.mrb[0].mxu0
    %v530 = vadd.f32 0.0, %v529
    %v531 = vpop.f32.mrb[0].mxu0
    %v532 = vpop.f32.mrb[0].mxu0
    %v533 = vadd.f32 0.0, %v532
    %v534 = vpop.f32.mrb[0].mxu0
    %535 = vmatprep.mubr.bf16.mxu0 0
    %536 = vmatmul.mubr.bf16.gmra.mrb[0].mxu0 %v493
    %v537 = vpop.f32.mrb[0].mxu0
    %v538 = vadd.f32 0.0, %v537
    %v539 = vpop.f32.mrb[0].mxu0
    %v540 = vpop.f32.mrb[0].mxu0
    %v541 = vpop.f32.mrb[0].mxu0
    %542 = vdwg.mxu0
    %v543 = vadd.f32 %v432, %v530
    %v544 = vadd.f32 %v433, %v533
    %v545 = vadd.f32 %v434, %v538
    %v546 = vld [vmem:[#allocation7] sm:$0xff]
    %v547 = vld [vmem:[#allocation7 + $0x8] sm:$0xff]
    %v548 = vld [vmem:[#allocation7 + $0x10] sm:$0xff]
    %v549 = vsel %vm160, %v546, -inf
    %550 = vmax.xlane.f32.xlu0 %v549
    %v551 = vpop.xlane.xlu0 %550
    %v552 = vsel %vm160, %v547, -inf
    %553 = vmax.xlane.f32.xlu0 %v552
    %v554 = vpop.xlane.xlu0 %553
    %v555 = vsel %vm160, %v548, -inf
    %556 = vmax.xlane.f32.xlu0 %v555
    %v557 = vpop.xlane.xlu0 %556
    %v558 = vsub.f32 %v546, %v551
    %v559 = vsub.f32 %v547, %v554
    %v560 = vsub.f32 %v548, %v557
    %v561 = vmul.f32 %v558, 1.442695
    %v562 = vpow.pop %v561
    %v563 = vmul.f32 %v559, 1.442695
    %v564 = vpow.pop %v563
    %v565 = vmul.f32 %v560, 1.442695
    %v566 = vpow.pop %v565
    %v567 = vsel %vm160, %v562, 0.0
    %568 = vadd.xlane.f32.xlu0 %v567
    %v569 = vpop.xlane.xlu0 %568
    %v570 = vsel %vm160, %v564, 0.0
    %571 = vadd.xlane.f32.xlu0 %v570
    %v572 = vpop.xlane.xlu0 %571
    %v573 = vsel %vm160, %v566, 0.0
    %574 = vadd.xlane.f32.xlu0 %v573
    %v575 = vpop.xlane.xlu0 %574
    %v576 = vrcp.pop %v569
    %v577 = vrcp.pop %v572
    %v578 = vrcp.pop %v575
    %v579 = vmul.f32 %v562, %v576
    %v580 = vmul.f32 %v564, %v577
    %v581 = vmul.f32 %v566, %v578
    %v582 = vpack.c.bf16 %v580, %v579
    %v583 = vpack.c.bf16 %v581, %v581
    %v584 = vld [vmem:[#allocation11] sm:$0xf]
    %v585 = vld [vmem:[#allocation11 + $0x4] sm:$0xf]
    %v586 = vld [vmem:[#allocation11 + $0x8] sm:$0xf]
    %v587 = vld [vmem:[#allocation11 + $0xc] sm:$0xf]
    %v592 = vunpack.c.l.b16 %v584
    %v593 = vunpack.c.l.b16 %v585
    %v594 = vunpack.c.l.b16 %v586
    %v595 = vunpack.c.l.b16 %v587
    %v596 = vpack.c.b16 %v593, %v592
    %v597 = vpack.c.b16 %v595, %v594
    %v601 = vsel %vm160, %v582, 0
    %v604 = vsel %vm160, %v583, 0
    %606 = vmatprep.subr.bf16.mxu0 0
    %607 = vmatpush1.bf16.msra.mxu0 %v596
    %608 = vmatprep.subr.bf16.mxu0 0
    %609 = vmatpush1.bf16.msra.mxu0 %v597
    %610 = vmatprep.subr.bf16.mxu0 0
    %611 = vmatpush1.bf16.msra.mxu0 0
    %612 = vmatprep.subr.bf16.mxu0 0
    %613 = vmatpush1.bf16.msra.mxu0 0
    %614 = vmatprep.subr.bf16.mxu0 0
    %615 = vmatpush1.bf16.msra.mxu0 0
    %616 = vmatprep.subr.bf16.mxu0 0
    %617 = vmatpush1.bf16.msra.mxu0 0
    %618 = vmatprep.subr.bf16.mxu0 0
    %619 = vmatpush1.bf16.msra.mxu0 0
    %620 = vmatprep.subr.bf16.mxu0 0
    %621 = vmatpush1.bf16.msra.mxu0 0
    %622 = vmatprep.subr.bf16.mxu0 0
    %623 = vmatpush1.bf16.msra.mxu0 0
    %624 = vmatprep.subr.bf16.mxu0 0
    %625 = vmatpush1.bf16.msra.mxu0 0
    %626 = vmatprep.subr.bf16.mxu0 0
    %627 = vmatpush1.bf16.msra.mxu0 0
    %628 = vmatprep.subr.bf16.mxu0 0
    %629 = vmatpush1.bf16.msra.mxu0 0
    %630 = vmatprep.subr.bf16.mxu0 0
    %631 = vmatpush1.bf16.msra.mxu0 0
    %632 = vmatprep.subr.bf16.mxu0 0
    %633 = vmatpush1.bf16.msra.mxu0 0
    %634 = vmatprep.subr.bf16.mxu0 0
    %635 = vmatpush1.bf16.msra.mxu0 0
    %636 = vmatprep.subr.bf16.mxu0 0
    %637 = vmatpush1.bf16.msra.mxu0 0
    %638 = vmatprep.mubr.bf16.mxu0 0
    %639 = vmatmul.mubr.bf16.gmra.mrb[0].mxu0 %v601
    %v640 = vpop.f32.mrb[0].mxu0
    %v641 = vadd.f32 0.0, %v640
    %v642 = vpop.f32.mrb[0].mxu0
    %v643 = vpop.f32.mrb[0].mxu0
    %v644 = vadd.f32 0.0, %v643
    %v645 = vpop.f32.mrb[0].mxu0
    %646 = vmatprep.mubr.bf16.mxu0 0
    %647 = vmatmul.mubr.bf16.gmra.mrb[0].mxu0 %v604
    %v648 = vpop.f32.mrb[0].mxu0
    %v649 = vadd.f32 0.0, %v648
    %v650 = vpop.f32.mrb[0].mxu0
    %v651 = vpop.f32.mrb[0].mxu0
    %v652 = vpop.f32.mrb[0].mxu0
    %653 = vdwg.mxu0
    %v654 = vadd.f32 %v543, %v641
    %v655 = vadd.f32 %v544, %v644
    %v656 = vadd.f32 %v545, %v649
    %657 = vst [vmem:[#allocation13] sm:$0xff] %v654
    %658 = vst [vmem:[#allocation13 + $0x8] sm:$0xff] %v655
    %659 = vst [vmem:[#allocation13 + $0x10] sm:$0xff] %v656
    // Predicated region
    $region66: #{tpu_custom_call.1} parent=1 // pred_check
      _
    $region67: #{tpu_custom_call.1} parent=1 // pred_check_branch
      %661 = sbr.rel (0) target = $region69
    $region68: #{tpu_custom_call.1} parent=1 // pred_region
      %s663 = ssub.s32 384, 384
      %664 = vsyncadd [#allocation4], %s663
      %s665 = sshll.u32 [#allocation13], 4
      %s666 = int_to_ptr.vmem [resolvable:$true] %s665
      %671 = dma.vmem_to_hbm [thread:$0]  %s666, 384, %s10, [#allocation4], 128, 128, 8
    $region69: #{tpu_custom_call.1} parent=1 // pred_fallthru
      _
    // Predicated region
    $region70: #{tpu_custom_call.1} parent=1 // pred_check
      _
    $region71: #{tpu_custom_call.1} parent=1 // pred_check_branch
      %673 = sbr.rel (0) target = $region73
    $region72: #{tpu_custom_call.1} parent=1 // pred_region
      %674 = dma.done [#allocation4], 384
    $region73: #{tpu_custom_call.1} parent=1 // pred_fallthru
      _
    %675 = vsyncpa [#allocation3], 1
    %676 = vsyncpa [#allocation6], 1
    %677 = vsyncpa [#allocation9], 1
    %678 = vsyncpa [#allocation12], 1
    %679 = vsyncpa [#allocation4], 1

</llo_original>
